<compile_context>
chip_gen: v7x
topology: tpu7x:2x2x1
jax: 0.10.0
libtpu: 0.0.40
codegen_flags: <defaults>
</compile_context>

<pallas_src>
import functools

import jax
import jax.numpy as jnp
from jax.experimental import pallas as pl
from jax.experimental.pallas import tpu as pltpu


def _round_up(x, m):
    return ((x + m - 1) // m) * m


_TM = 256                 # row tile (A_hat rows / output rows), tiled path
_TK = 512                 # reduction tile over A_hat columns, tiled path
_FUSED_MAX_NODES = 1024   # single fused-kernel path when padded N <= this


def _padded_size(n):
    """Pad node count so block shapes satisfy the (8,128)/full-extent rule."""
    if n <= _FUSED_MAX_NODES:
        return _round_up(n, 8)
    return _round_up(n, max(_TM, _TK))   # multiple of both _TM and _TK


# ---------------------------------------------------------------------------
# Fused single-call kernel (small graphs): whole forward, A_hat read once.
# ---------------------------------------------------------------------------
def _fused_encoder_kernel(a_ref, x_ref, w1_ref, b1_ref, wml_ref, bml_ref,
                          o_ref):
    # Layer 1, aggregate-first (F_in < F_hid): h = relu((A @ x) @ W1 + b1)
    ax = jnp.dot(a_ref[...], x_ref[...], preferred_element_type=jnp.float32)
    h = jnp.dot(ax.astype(w1_ref.dtype), w1_ref[...],
                preferred_element_type=jnp.float32)
    h = jnp.maximum(h + b1_ref[...], 0.0)
    # Fused mu/logstd layer, transform-first: out = A @ (h @ [Wmu||Wls]) + b
    hw = jnp.dot(h.astype(wml_ref.dtype), wml_ref[...],
                 preferred_element_type=jnp.float32)
    out = jnp.dot(a_ref[...], hw.astype(a_ref.dtype),
                  preferred_element_type=jnp.float32)
    o_ref[...] = (out + bml_ref[...]).astype(o_ref.dtype)


def _fused_forward(a_hat, x_p, w1, b1, w_ml, b_ml, n_pad):
    f_ml = w_ml.shape[1]
    return pl.pallas_call(
        _fused_encoder_kernel,
        out_shape=jax.ShapeDtypeStruct((n_pad, f_ml), jnp.float32),
        compiler_params=pltpu.CompilerParams(
            vmem_limit_bytes=32 * 1024 * 1024),
    )(a_hat, x_p, w1, b1, w_ml, b_ml)


# ---------------------------------------------------------------------------
# Tiled path (large graphs): two gridded propagation kernels.
# ---------------------------------------------------------------------------
def _layer1_kernel(a_ref, x_ref, w1_ref, b1_ref, wml_ref, o_ref, acc_ref):
    k = pl.program_id(1)

    @pl.when(k == 0)
    def _():
        acc_ref[...] = jnp.zeros_like(acc_ref)

    acc_ref[...] += jnp.dot(a_ref[...], x_ref[...],
                            preferred_element_type=jnp.float32)

    @pl.when(k == pl.num_programs(1) - 1)
    def _():
        # h = relu((A @ x) @ W1 + b1); emit hw = h @ [Wmu||Wls] directly so the
        # hidden activation never round-trips through HBM.
        h = jnp.dot(acc_ref[...].astype(w1_ref.dtype), w1_ref[...],
                    preferred_element_type=jnp.float32)
        h = jnp.maximum(h + b1_ref[...], 0.0)
        hw = jnp.dot(h.astype(wml_ref.dtype), wml_ref[...],
                     preferred_element_type=jnp.float32)
        o_ref[...] = hw.astype(o_ref.dtype)


def _layer2_kernel(a_ref, hw_ref, bml_ref, o_ref, acc_ref):
    k = pl.program_id(1)

    @pl.when(k == 0)
    def _():
        acc_ref[...] = jnp.zeros_like(acc_ref)

    acc_ref[...] += jnp.dot(a_ref[...], hw_ref[...],
                            preferred_element_type=jnp.float32)

    @pl.when(k == pl.num_programs(1) - 1)
    def _():
        o_ref[...] = (acc_ref[...] + bml_ref[...]).astype(o_ref.dtype)


def _tiled_forward(a_hat, x_p, w1, b1, w_ml, b_ml, n_pad):
    f_in = x_p.shape[1]
    f_hid = w1.shape[1]
    f_ml = w_ml.shape[1]
    grid = (n_pad // _TM, n_pad // _TK)
    cparams = pltpu.CompilerParams(
        dimension_semantics=("parallel", "arbitrary"),
        vmem_limit_bytes=32 * 1024 * 1024)

    # Layer 1: aggregate-first; epilogue applies W1, relu and [Wmu||Wls].
    hw = pl.pallas_call(
        _layer1_kernel,
        out_shape=jax.ShapeDtypeStruct((n_pad, f_ml), jnp.bfloat16),
        grid_spec=pltpu.PrefetchScalarGridSpec(
            num_scalar_prefetch=0,
            grid=grid,
            in_specs=[
                pl.BlockSpec((_TM, _TK), lambda i, k: (i, k)),     # A_hat tile
                pl.BlockSpec((_TK, f_in), lambda i, k: (k, 0)),    # x rows
                pl.BlockSpec((f_in, f_hid), lambda i, k: (0, 0)),  # W1
                pl.BlockSpec((1, f_hid), lambda i, k: (0, 0)),     # b1
                pl.BlockSpec((f_hid, f_ml), lambda i, k: (0, 0)),  # W_mu||W_ls
            ],
            out_specs=pl.BlockSpec((_TM, f_ml), lambda i, k: (i, 0)),
            scratch_shapes=[pltpu.VMEM((_TM, f_in), jnp.float32)],
        ),
        compiler_params=cparams,
    )(a_hat, x_p, w1, b1, w_ml)

    # Fused mu/logstd layer: out = A_hat @ hw + [b_mu||b_ls].
    out = pl.pallas_call(
        _layer2_kernel,
        out_shape=jax.ShapeDtypeStruct((n_pad, f_ml), jnp.float32),
        grid_spec=pltpu.PrefetchScalarGridSpec(
            num_scalar_prefetch=0,
            grid=grid,
            in_specs=[
                pl.BlockSpec((_TM, _TK), lambda i, k: (i, k)),     # A_hat tile
                pl.BlockSpec((_TK, f_ml), lambda i, k: (k, 0)),    # hw rows
                pl.BlockSpec((1, f_ml), lambda i, k: (0, 0)),      # b_mu||b_ls
            ],
            out_specs=pl.BlockSpec((_TM, f_ml), lambda i, k: (i, 0)),
            scratch_shapes=[pltpu.VMEM((_TM, f_ml), jnp.float32)],
        ),
        compiler_params=cparams,
    )(a_hat, hw, b_ml)
    return out


# ---------------------------------------------------------------------------
# Glue (plain JAX): build normalized dense adjacency from edge_index
# ---------------------------------------------------------------------------
def gcn_normalized_adjacency(edge_index, num_nodes):
    """Dense A_hat = D^-1/2 (A + I) D^-1/2 with A[dst, src] += 1 per edge.

    Normalization is done in f32; the caller casts to bf16 only AFTER
    normalization (rsqrt precision on high-degree nodes).
    """
    src = edge_index[0]
    dst = edge_index[1]
    a = jnp.zeros((num_nodes, num_nodes), jnp.float32)
    a = a.at[dst, src].add(1.0)                       # message src -> dst
    a = a + jnp.eye(num_nodes, dtype=jnp.float32)     # add self loops
    deg = a.sum(axis=1)
    d_inv_sqrt = jnp.where(deg > 0, jax.lax.rsqrt(deg), 0.0)
    return d_inv_sqrt[:, None] * a * d_inv_sqrt[None, :]


# ---------------------------------------------------------------------------
# VariationalGCNEncoder forward
# ---------------------------------------------------------------------------
def init_params(key, in_channels, hidden_channels, out_channels):
    """Deterministic glorot-uniform weights, zero biases (GCNConv defaults)."""
    def glorot(k, fan_in, fan_out):
        limit = jnp.sqrt(6.0 / (fan_in + fan_out))
        return jax.random.uniform(k, (fan_in, fan_out), jnp.float32,
                                  -limit, limit)

    k1, k2, k3 = jax.random.split(key, 3)
    return {
        "w1": glorot(k1, in_channels, hidden_channels),
        "b1": jnp.zeros((hidden_channels,), jnp.float32),
        "w_mu": glorot(k2, hidden_channels, out_channels),
        "b_mu": jnp.zeros((out_channels,), jnp.float32),
        "w_ls": glorot(k3, hidden_channels, out_channels),
        "b_ls": jnp.zeros((out_channels,), jnp.float32),
    }


@jax.jit
def variational_gcn_encoder(params, x, edge_index):
    n = x.shape[0]
    n_pad = _padded_size(n)
    pad_n = n_pad - n

    # Normalize in f32, then cast the HBM-bound operands to bf16 for the MXU.
    a_hat = gcn_normalized_adjacency(edge_index, n)
    a_hat = jnp.pad(a_hat, ((0, pad_n), (0, pad_n))).astype(jnp.bfloat16)
    x_p = jnp.pad(x.astype(jnp.float32),
                  ((0, pad_n), (0, 0))).astype(jnp.bfloat16)

    w1 = params["w1"].astype(jnp.bfloat16)
    b1 = params["b1"].reshape(1, -1).astype(jnp.float32)
    w_ml = jnp.concatenate([params["w_mu"], params["w_ls"]],
                           axis=1).astype(jnp.bfloat16)
    b_ml = jnp.concatenate([params["b_mu"], params["b_ls"]],
                           axis=0).reshape(1, -1).astype(jnp.float32)

    if n_pad <= _FUSED_MAX_NODES:
        out = _fused_forward(a_hat, x_p, w1, b1, w_ml, b_ml, n_pad)
    else:
        out = _tiled_forward(a_hat, x_p, w1, b1, w_ml, b_ml, n_pad)

    out_c = params["w_mu"].shape[1]
    mu = out[:n, :out_c]
    logstd = out[:n, out_c:2 * out_c]
    return mu, logstd


if __name__ == "__main__":
    # Small synthetic config: in_channels=8, hidden_channels=32, out_channels=16
    N, E = 16, 40
    IN_C, HID_C, OUT_C = 8, 32, 16

    key = jax.random.PRNGKey(0)
    k_x, k_e, k_p = jax.random.split(key, 3)

    x = jax.random.normal(k_x, (N, IN_C), jnp.float32)
    edge_index = jax.random.randint(k_e, (2, E), 0, N, dtype=jnp.int32)

    params = init_params(k_p, IN_C, HID_C, OUT_C)

    mu, logstd = variational_gcn_encoder(params, x, edge_index)
    jax.block_until_ready((mu, logstd))

    assert mu.shape == (N, OUT_C) and logstd.shape == (N, OUT_C)
    assert jnp.all(jnp.isfinite(mu)) and jnp.all(jnp.isfinite(logstd))
    print("KERNEL_OK")
</pallas_src>

<mosaic_0001>
module attributes {stable_mosaic.version = 11 : i64} {
  func.func @_fused_encoder_kernel(%arg0: memref<16x16xbf16, #tpu.memory_space<vmem>>, %arg1: memref<16x8xbf16, #tpu.memory_space<vmem>>, %arg2: memref<8x32xbf16, #tpu.memory_space<vmem>>, %arg3: memref<1x32xf32, #tpu.memory_space<vmem>>, %arg4: memref<32x32xbf16, #tpu.memory_space<vmem>>, %arg5: memref<1x32xf32, #tpu.memory_space<vmem>>, %arg6: memref<16x32xf32, #tpu.memory_space<vmem>>) attributes {dimension_semantics = [], scalar_prefetch = 0 : i64, scratch_operands = 0 : i64, tpu.core_type = #tpu.core_type<tc>} {
    %c0 = arith.constant 0 : index
    %c0_0 = arith.constant 0 : index
    %0 = vector.load %arg0[%c0, %c0_0] : memref<16x16xbf16, #tpu.memory_space<vmem>>, vector<16x16xbf16>
    %c0_1 = arith.constant 0 : index
    %c0_2 = arith.constant 0 : index
    %1 = vector.load %arg1[%c0_1, %c0_2] : memref<16x8xbf16, #tpu.memory_space<vmem>>, vector<16x8xbf16>
    %cst = arith.constant dense<0.000000e+00> : vector<16x8xf32>
    %2 = tpu.matmul %0, %1, %cst {dimension_numbers = #tpu.dot_dimension_numbers<[1], [0], [0], [1], [0, 0, 1, 1], [], []>} : vector<16x16xbf16>, vector<16x8xbf16>, vector<16x8xf32> -> vector<16x8xf32>
    %3 = arith.truncf %2 : vector<16x8xf32> to vector<16x8xbf16>
    %c0_3 = arith.constant 0 : index
    %c0_4 = arith.constant 0 : index
    %4 = vector.load %arg2[%c0_3, %c0_4] : memref<8x32xbf16, #tpu.memory_space<vmem>>, vector<8x32xbf16>
    %cst_5 = arith.constant dense<0.000000e+00> : vector<16x32xf32>
    %5 = tpu.matmul %3, %4, %cst_5 {dimension_numbers = #tpu.dot_dimension_numbers<[1], [0], [0], [1], [0, 0, 1, 1], [], []>} : vector<16x8xbf16>, vector<8x32xbf16>, vector<16x32xf32> -> vector<16x32xf32>
    %c0_6 = arith.constant 0 : index
    %c0_7 = arith.constant 0 : index
    %6 = vector.load %arg3[%c0_6, %c0_7] : memref<1x32xf32, #tpu.memory_space<vmem>>, vector<1x32xf32>
    %7 = vector.broadcast %6 : vector<1x32xf32> to vector<16x32xf32>
    %8 = arith.addf %5, %7 : vector<16x32xf32>
    %cst_8 = arith.constant 0.000000e+00 : f32
    %9 = vector.broadcast %cst_8 : f32 to vector<16x32xf32>
    %10 = arith.maximumf %8, %9 : vector<16x32xf32>
    %11 = arith.truncf %10 : vector<16x32xf32> to vector<16x32xbf16>
    %c0_9 = arith.constant 0 : index
    %c0_10 = arith.constant 0 : index
    %12 = vector.load %arg4[%c0_9, %c0_10] : memref<32x32xbf16, #tpu.memory_space<vmem>>, vector<32x32xbf16>
    %cst_11 = arith.constant dense<0.000000e+00> : vector<16x32xf32>
    %13 = tpu.matmul %11, %12, %cst_11 {dimension_numbers = #tpu.dot_dimension_numbers<[1], [0], [0], [1], [0, 0, 1, 1], [], []>} : vector<16x32xbf16>, vector<32x32xbf16>, vector<16x32xf32> -> vector<16x32xf32>
    %c0_12 = arith.constant 0 : index
    %c0_13 = arith.constant 0 : index
    %14 = vector.load %arg0[%c0_12, %c0_13] : memref<16x16xbf16, #tpu.memory_space<vmem>>, vector<16x16xbf16>
    %15 = arith.truncf %13 : vector<16x32xf32> to vector<16x32xbf16>
    %cst_14 = arith.constant dense<0.000000e+00> : vector<16x32xf32>
    %16 = tpu.matmul %14, %15, %cst_14 {dimension_numbers = #tpu.dot_dimension_numbers<[1], [0], [0], [1], [0, 0, 1, 1], [], []>} : vector<16x16xbf16>, vector<16x32xbf16>, vector<16x32xf32> -> vector<16x32xf32>
    %c0_15 = arith.constant 0 : index
    %c0_16 = arith.constant 0 : index
    %17 = vector.load %arg5[%c0_15, %c0_16] : memref<1x32xf32, #tpu.memory_space<vmem>>, vector<1x32xf32>
    %18 = vector.broadcast %17 : vector<1x32xf32> to vector<16x32xf32>
    %19 = arith.addf %16, %18 : vector<16x32xf32>
    %c0_17 = arith.constant 0 : index
    %c0_18 = arith.constant 0 : index
    %20 = vector.load %arg6[%c0_17, %c0_18] : memref<16x32xf32, #tpu.memory_space<vmem>>, vector<16x32xf32>
    tpu.vector_store %arg6[%c0_17, %c0_18], %19 {strides = array<i32>} : memref<16x32xf32, #tpu.memory_space<vmem>>, vector<16x32xf32>,
    return
  }
}

</mosaic_0001>

<llo_original>
// kernel: variational_gcn_encoder.1
$region0: #{variational_gcn_encoder.1}
  #allocation0 [shape = 'u32[]', space=smem, size = 0x4, offset = 0x4, fixed_abs, tag = 'smem constant byte address 0x4 - core index']
  #allocation1 [shape = 'u32[144,128]{1,0:T(1,128)}', space=vmem, size = 0x12000, scoped, tag = 'internal scratch']
  %s0 = inlined_call_operand.vmem [shape: bf16[16,16], index: 0, kind: input, shape index: {}]
  %s1 = inlined_call_operand.vmem [shape: bf16[16,8], index: 1, kind: input, shape index: {}]
  %s2 = inlined_call_operand.vmem [shape: bf16[8,32], index: 2, kind: input, shape index: {}]
  %s3 = inlined_call_operand.vmem [shape: f32[1,32], index: 3, kind: input, shape index: {}]
  %s4 = inlined_call_operand.vmem [shape: bf16[32,32], index: 4, kind: input, shape index: {}]
  %s5 = inlined_call_operand.vmem [shape: f32[1,32], index: 5, kind: input, shape index: {}]
  %s6 = inlined_call_operand.vmem [shape: f32[16,32], index: 6, kind: output, shape index: {}]
  %s7 = sld [smem:[#allocation0]]
  $region34: #{variational_gcn_encoder.1} parent=0
    _
  %s9 = ssub.s32 1, %s7
  %s10 = scalar_select 0, %s9, %s7
  // Predicated region
  $region2: #{variational_gcn_encoder.1} parent=0 // pred_check
    _
  $region3: #{variational_gcn_encoder.1} parent=0 // pred_check_branch
    %12 = sbr.rel (0) target = $region5
  $region4: #{variational_gcn_encoder.1} parent=0 // pred_region
    _
  $region5: #{variational_gcn_encoder.1} parent=0 // pred_fallthru
    _
  // Predicated region
  $region6: #{variational_gcn_encoder.1} parent=0 // pred_check
    _
  $region7: #{variational_gcn_encoder.1} parent=0 // pred_check_branch
    %14 = sbr.rel (0) target = $region9
  $region8: #{variational_gcn_encoder.1} parent=0 // pred_region
    _
  $region9: #{variational_gcn_encoder.1} parent=0 // pred_fallthru
    _
  // Predicated region
  $region10: #{variational_gcn_encoder.1} parent=0 // pred_check
    _
  $region11: #{variational_gcn_encoder.1} parent=0 // pred_check_branch
    %16 = sbr.rel (0) target = $region13
  $region12: #{variational_gcn_encoder.1} parent=0 // pred_region
    _
  $region13: #{variational_gcn_encoder.1} parent=0 // pred_fallthru
    _
  // Predicated region
  $region14: #{variational_gcn_encoder.1} parent=0 // pred_check
    _
  $region15: #{variational_gcn_encoder.1} parent=0 // pred_check_branch
    %18 = sbr.rel (0) target = $region17
  $region16: #{variational_gcn_encoder.1} parent=0 // pred_region
    _
  $region17: #{variational_gcn_encoder.1} parent=0 // pred_fallthru
    _
  // Predicated region
  $region18: #{variational_gcn_encoder.1} parent=0 // pred_check
    _
  $region19: #{variational_gcn_encoder.1} parent=0 // pred_check_branch
    %20 = sbr.rel (0) target = $region21
  $region20: #{variational_gcn_encoder.1} parent=0 // pred_region
    _
  $region21: #{variational_gcn_encoder.1} parent=0 // pred_fallthru
    _
  // Predicated region
  $region22: #{variational_gcn_encoder.1} parent=0 // pred_check
    _
  $region23: #{variational_gcn_encoder.1} parent=0 // pred_check_branch
    %22 = sbr.rel (0) target = $region25
  $region24: #{variational_gcn_encoder.1} parent=0 // pred_region
    _
  $region25: #{variational_gcn_encoder.1} parent=0 // pred_fallthru
    _
  %v24 = vld [vmem:[%s0] sm:$0xf]
  %v25 = vld [vmem:[%s0 + $0x4] sm:$0xf]
  %v26 = vld [vmem:[%s1] sm:$0xf]
  %v27 = vld [vmem:[%s1 + $0x4] sm:$0xf]
  %v30 = vunpack.c.l.b16 %v24
  %v31 = vunpack.c.l.b16 %v25
  %v32 = vpack.c.b16 %v31, %v30
  %v35 = vunpack.c.l.b16 %v26
  %v36 = vunpack.c.l.b16 %v27
  %v37 = vpack.c.b16 %v36, %v35
  %vm39 = vcmask 130048
  %v41 = vsel %vm39, %v32, 0
  %43 = vmatprep.subr.bf16.mxu0 0
  %44 = vmatpush1.bf16.msra.mxu0 %v37
  %45 = vmatprep.subr.bf16.mxu0 0
  %46 = vmatpush1.bf16.msra.mxu0 0
  %47 = vmatprep.subr.bf16.mxu0 0
  %48 = vmatpush1.bf16.msra.mxu0 0
  %49 = vmatprep.subr.bf16.mxu0 0
  %50 = vmatpush1.bf16.msra.mxu0 0
  %51 = vmatprep.subr.bf16.mxu0 0
  %52 = vmatpush1.bf16.msra.mxu0 0
  %53 = vmatprep.subr.bf16.mxu0 0
  %54 = vmatpush1.bf16.msra.mxu0 0
  %55 = vmatprep.subr.bf16.mxu0 0
  %56 = vmatpush1.bf16.msra.mxu0 0
  %57 = vmatprep.subr.bf16.mxu0 0
  %58 = vmatpush1.bf16.msra.mxu0 0
  %59 = vmatprep.subr.bf16.mxu0 0
  %60 = vmatpush1.bf16.msra.mxu0 0
  %61 = vmatprep.subr.bf16.mxu0 0
  %62 = vmatpush1.bf16.msra.mxu0 0
  %63 = vmatprep.subr.bf16.mxu0 0
  %64 = vmatpush1.bf16.msra.mxu0 0
  %65 = vmatprep.subr.bf16.mxu0 0
  %66 = vmatpush1.bf16.msra.mxu0 0
  %67 = vmatprep.subr.bf16.mxu0 0
  %68 = vmatpush1.bf16.msra.mxu0 0
  %69 = vmatprep.subr.bf16.mxu0 0
  %70 = vmatpush1.bf16.msra.mxu0 0
  %71 = vmatprep.subr.bf16.mxu0 0
  %72 = vmatpush1.bf16.msra.mxu0 0
  %73 = vmatprep.subr.bf16.mxu0 0
  %74 = vmatpush1.bf16.msra.mxu0 0
  %75 = vmatprep.mubr.bf16.mxu0 0
  %76 = vmatmul.mubr.bf16.gmra.mrb[0].mxu0 %v41
  %v77 = vpop.f32.mrb[0].mxu0
  %v78 = vadd.f32 0.0, %v77
  %v79 = vpop.f32.mrb[0].mxu0
  %v80 = vpop.f32.mrb[0].mxu0
  %v81 = vadd.f32 0.0, %v80
  %v82 = vpop.f32.mrb[0].mxu0
  %83 = vdwg.mxu0
  %v84 = vpack.c.bf16 %v81, %v78
  %v85 = vld [vmem:[%s2] sm:$0xf]
  %v86 = vld [vmem:[%s3] sm:$0x1]
  %v88 = vlaneseq
  %v89 = vshrl.u32 %v88, 7
  %v90 = vsub.s32 0, %v89
  %v91 = vrot.slane %v86, %v90
  %vm93 = vcmask 64512
  %v95 = vsel %vm93, %v84, 0
  %vm97 = vcmask 1043456
  %v99 = vsel %vm97, %v85, 0
  %101 = vmatprep.subr.bf16.mxu0 0
  %102 = vmatpush1.bf16.msra.mxu0 %v99
  %103 = vmatprep.subr.bf16.mxu0 0
  %104 = vmatpush1.bf16.msra.mxu0 0
  %105 = vmatprep.subr.bf16.mxu0 0
  %106 = vmatpush1.bf16.msra.mxu0 0
  %107 = vmatprep.subr.bf16.mxu0 0
  %108 = vmatpush1.bf16.msra.mxu0 0
  %109 = vmatprep.subr.bf16.mxu0 0
  %110 = vmatpush1.bf16.msra.mxu0 0
  %111 = vmatprep.subr.bf16.mxu0 0
  %112 = vmatpush1.bf16.msra.mxu0 0
  %113 = vmatprep.subr.bf16.mxu0 0
  %114 = vmatpush1.bf16.msra.mxu0 0
  %115 = vmatprep.subr.bf16.mxu0 0
  %116 = vmatpush1.bf16.msra.mxu0 0
  %117 = vmatprep.subr.bf16.mxu0 0
  %118 = vmatpush1.bf16.msra.mxu0 0
  %119 = vmatprep.subr.bf16.mxu0 0
  %120 = vmatpush1.bf16.msra.mxu0 0
  %121 = vmatprep.subr.bf16.mxu0 0
  %122 = vmatpush1.bf16.msra.mxu0 0
  %123 = vmatprep.subr.bf16.mxu0 0
  %124 = vmatpush1.bf16.msra.mxu0 0
  %125 = vmatprep.subr.bf16.mxu0 0
  %126 = vmatpush1.bf16.msra.mxu0 0
  %127 = vmatprep.subr.bf16.mxu0 0
  %128 = vmatpush1.bf16.msra.mxu0 0
  %129 = vmatprep.subr.bf16.mxu0 0
  %130 = vmatpush1.bf16.msra.mxu0 0
  %131 = vmatprep.subr.bf16.mxu0 0
  %132 = vmatpush1.bf16.msra.mxu0 0
  %133 = vmatprep.mubr.bf16.mxu0 0
  %134 = vmatmul.mubr.bf16.gmra.mrb[0].mxu0 %v95
  %v135 = vpop.f32.mrb[0].mxu0
  %v136 = vadd.f32 %v91, %v135
  %v137 = vpop.f32.mrb[0].mxu0
  %v138 = vpop.f32.mrb[0].mxu0
  %v139 = vadd.f32 %v91, %v138
  %v140 = vpop.f32.mrb[0].mxu0
  %141 = vdwg.mxu0
  %v142 = vmax.f32 %v136, 0.0
  %v143 = vmax.f32 %v139, 0.0
  %v144 = vpack.c.bf16 %v143, %v142
  %v145 = vld [vmem:[%s4] sm:$0xf]
  %v146 = vld [vmem:[%s4 + $0x4] sm:$0xf]
  %v147 = vld [vmem:[%s4 + $0x8] sm:$0xf]
  %v148 = vld [vmem:[%s4 + $0xc] sm:$0xf]
  %v153 = vunpack.c.l.b16 %v145
  %v154 = vunpack.c.l.b16 %v146
  %v155 = vunpack.c.l.b16 %v147
  %v156 = vunpack.c.l.b16 %v148
  %v157 = vpack.c.b16 %v154, %v153
  %v158 = vpack.c.b16 %v156, %v155
  %vm161 = vcmask 261120
  %v163 = vsel %vm161, %v144, 0
  %165 = vmatprep.subr.bf16.mxu0 0
  %166 = vmatpush1.bf16.msra.mxu0 %v157
  %167 = vmatprep.subr.bf16.mxu0 0
  %168 = vmatpush1.bf16.msra.mxu0 %v158
  %169 = vmatprep.subr.bf16.mxu0 0
  %170 = vmatpush1.bf16.msra.mxu0 0
  %171 = vmatprep.subr.bf16.mxu0 0
  %172 = vmatpush1.bf16.msra.mxu0 0
  %173 = vmatprep.subr.bf16.mxu0 0
  %174 = vmatpush1.bf16.msra.mxu0 0
  %175 = vmatprep.subr.bf16.mxu0 0
  %176 = vmatpush1.bf16.msra.mxu0 0
  %177 = vmatprep.subr.bf16.mxu0 0
  %178 = vmatpush1.bf16.msra.mxu0 0
  %179 = vmatprep.subr.bf16.mxu0 0
  %180 = vmatpush1.bf16.msra.mxu0 0
  %181 = vmatprep.subr.bf16.mxu0 0
  %182 = vmatpush1.bf16.msra.mxu0 0
  %183 = vmatprep.subr.bf16.mxu0 0
  %184 = vmatpush1.bf16.msra.mxu0 0
  %185 = vmatprep.subr.bf16.mxu0 0
  %186 = vmatpush1.bf16.msra.mxu0 0
  %187 = vmatprep.subr.bf16.mxu0 0
  %188 = vmatpush1.bf16.msra.mxu0 0
  %189 = vmatprep.subr.bf16.mxu0 0
  %190 = vmatpush1.bf16.msra.mxu0 0
  %191 = vmatprep.subr.bf16.mxu0 0
  %192 = vmatpush1.bf16.msra.mxu0 0
  %193 = vmatprep.subr.bf16.mxu0 0
  %194 = vmatpush1.bf16.msra.mxu0 0
  %195 = vmatprep.subr.bf16.mxu0 0
  %196 = vmatpush1.bf16.msra.mxu0 0
  %197 = vmatprep.mubr.bf16.mxu0 0
  %198 = vmatmul.mubr.bf16.gmra.mrb[0].mxu0 %v163
  %v199 = vpop.f32.mrb[0].mxu0
  %v200 = vadd.f32 0.0, %v199
  %v201 = vpop.f32.mrb[0].mxu0
  %v202 = vpop.f32.mrb[0].mxu0
  %v203 = vadd.f32 0.0, %v202
  %v204 = vpop.f32.mrb[0].mxu0
  %205 = vdwg.mxu0
  %v206 = vpack.c.bf16 %v203, %v200
  %v207 = vld [vmem:[%s5] sm:$0x1]
  %v209 = vlaneseq
  %v210 = vshrl.u32 %v209, 7
  %v211 = vsub.s32 0, %v210
  %v212 = vrot.slane %v207, %v211
  %214 = vmatprep.subr.bf16.mxu0 0
  %215 = vmatpush1.bf16.msra.mxu0 %v206
  %216 = vmatprep.subr.bf16.mxu0 0
  %217 = vmatpush1.bf16.msra.mxu0 0
  %218 = vmatprep.subr.bf16.mxu0 0
  %219 = vmatpush1.bf16.msra.mxu0 0
  %220 = vmatprep.subr.bf16.mxu0 0
  %221 = vmatpush1.bf16.msra.mxu0 0
  %222 = vmatprep.subr.bf16.mxu0 0
  %223 = vmatpush1.bf16.msra.mxu0 0
  %224 = vmatprep.subr.bf16.mxu0 0
  %225 = vmatpush1.bf16.msra.mxu0 0
  %226 = vmatprep.subr.bf16.mxu0 0
  %227 = vmatpush1.bf16.msra.mxu0 0
  %228 = vmatprep.subr.bf16.mxu0 0
  %229 = vmatpush1.bf16.msra.mxu0 0
  %230 = vmatprep.subr.bf16.mxu0 0
  %231 = vmatpush1.bf16.msra.mxu0 0
  %232 = vmatprep.subr.bf16.mxu0 0
  %233 = vmatpush1.bf16.msra.mxu0 0
  %234 = vmatprep.subr.bf16.mxu0 0
  %235 = vmatpush1.bf16.msra.mxu0 0
  %236 = vmatprep.subr.bf16.mxu0 0
  %237 = vmatpush1.bf16.msra.mxu0 0
  %238 = vmatprep.subr.bf16.mxu0 0
  %239 = vmatpush1.bf16.msra.mxu0 0
  %240 = vmatprep.subr.bf16.mxu0 0
  %241 = vmatpush1.bf16.msra.mxu0 0
  %242 = vmatprep.subr.bf16.mxu0 0
  %243 = vmatpush1.bf16.msra.mxu0 0
  %244 = vmatprep.subr.bf16.mxu0 0
  %245 = vmatpush1.bf16.msra.mxu0 0
  %246 = vmatprep.mubr.bf16.mxu0 0
  %247 = vmatmul.mubr.bf16.gmra.mrb[0].mxu0 %v41
  %v248 = vpop.f32.mrb[0].mxu0
  %v249 = vadd.f32 %v212, %v248
  %v250 = vpop.f32.mrb[0].mxu0
  %v251 = vpop.f32.mrb[0].mxu0
  %v252 = vadd.f32 %v212, %v251
  %v253 = vpop.f32.mrb[0].mxu0
  %254 = vdwg.mxu0
  %255 = vst.msk [vmem:[%s6] sm:$0xff] %vm161, %v249
  %256 = vst.msk [vmem:[%s6 + $0x8] sm:$0xff] %vm161, %v252
  // Predicated region
  $region26: #{variational_gcn_encoder.1} parent=0 // pred_check
    _
  $region27: #{variational_gcn_encoder.1} parent=0 // pred_check_branch
    %258 = sbr.rel (0) target = $region29
  $region28: #{variational_gcn_encoder.1} parent=0 // pred_region
    _
  $region29: #{variational_gcn_encoder.1} parent=0 // pred_fallthru
    _
  // Predicated region
  $region30: #{variational_gcn_encoder.1} parent=0 // pred_check
    _
  $region31: #{variational_gcn_encoder.1} parent=0 // pred_check_branch
    %260 = sbr.rel (0) target = $region33
  $region32: #{variational_gcn_encoder.1} parent=0 // pred_region
    _
  $region33: #{variational_gcn_encoder.1} parent=0 // pred_fallthru
    _

</llo_original>
